<compile_context>
chip_gen: v7x
topology: tpu7x:2x2x1
jax: 0.10.0
libtpu: 0.0.40
codegen_flags: <defaults>
</compile_context>

<pallas_src>
import functools

import jax
import jax.numpy as jnp
from jax.experimental import pallas as pl
from jax.experimental.pallas import tpu as pltpu

K_IN = 784
H1 = 128
H2 = 64
H2_PAD = 128
OUT = 10
OUT_PAD = 128


def _round_up(n, m):
    return ((n + m - 1) // m) * m


# ------------------------------- kernel ------------------------------------ #
def _mlp_logits_kernel(x_ref, w1_ref, b1_ref, w2_ref, b2_ref, w3_ref, b3_ref,
                       logits_ref, tmax_ref, tsum_ref, *, batch, tile_b):
    """Per batch tile: 3-layer MLP (bf16 MXU matmuls, f32 accumulation) plus
    per-tile softmax partials (max, sum-exp) over the *valid* flattened logits."""
    # bf16 cast done in-kernel: x streams from HBM exactly once, as f32.
    x = x_ref[...].astype(jnp.bfloat16)                          # (tile_b, 784)

    h = jnp.dot(x, w1_ref[...], preferred_element_type=jnp.float32) + b1_ref[...]
    h = jnp.maximum(h, 0.0)                                      # relu (+dropout=id)

    h = jnp.dot(h.astype(jnp.bfloat16), w2_ref[...],
                preferred_element_type=jnp.float32) + b2_ref[...]
    h = jnp.maximum(h, 0.0)

    h = jnp.dot(h.astype(jnp.bfloat16), w3_ref[...],
                preferred_element_type=jnp.float32) + b3_ref[...]
    h = jnp.maximum(h, 0.0)                                      # (tile_b, 128)

    logits_ref[...] = h                                          # lane-dense store

    # Partials of the global (flatten + dim=0) log_softmax.  Padded lanes
    # (>= 10) and out-of-bounds batch rows (last, uneven tile) must NOT
    # pollute the normalizer.
    lane = jax.lax.broadcasted_iota(jnp.int32, h.shape, 1)
    row = jax.lax.broadcasted_iota(jnp.int32, h.shape, 0) + pl.program_id(0) * tile_b
    valid = (lane < OUT) & (row < batch)
    z = jnp.where(valid, h, -jnp.inf)
    m = jnp.max(z)                                               # tile max (finite)
    s = jnp.sum(jnp.where(valid, jnp.exp(z - m), 0.0))           # tile sum-exp
    tmax_ref[...] = jnp.full((1, 1, 1), m, dtype=jnp.float32)
    tsum_ref[...] = jnp.full((1, 1, 1), s, dtype=jnp.float32)


# ------------------------------ host wrappers ------------------------------ #
def pack_params(params):
    """Plain-JAX parameter setup: (in, out) layout, lane-pad fc2/fc3 to 128
    output features, weights in bf16, biases in f32 row-vectors."""
    w1, b1, w2, b2, w3, b3 = params
    w1p = w1.astype(jnp.bfloat16)                                          # (784, 128)
    b1p = b1.reshape(1, H1).astype(jnp.float32)
    w2p = jnp.zeros((H1, H2_PAD), jnp.float32).at[:, :H2].set(w2).astype(jnp.bfloat16)
    b2p = jnp.zeros((1, H2_PAD), jnp.float32).at[0, :H2].set(b2)
    w3p = jnp.zeros((H2_PAD, OUT_PAD), jnp.float32).at[:H2, :OUT].set(w3).astype(jnp.bfloat16)
    b3p = jnp.zeros((1, OUT_PAD), jnp.float32).at[0, :OUT].set(b3)
    return w1p, b1p, w2p, b2p, w3p, b3p


def _pick_tile_b(batch, requested):
    t = max(8, _round_up(int(requested), 8))
    t = min(t, _round_up(batch, 8))          # never larger than the batch
    if batch > 8:
        # Keep >= 2 grid steps so the "parallel" axis can split across the two
        # v7x TensorCores (irrelevant for single-core v5e/v6e).
        t = min(t, max(8, _round_up((batch + 1) // 2, 8)))
    return max(8, t)


@functools.partial(jax.jit, static_argnames=("tile_b",))
def forward(x, packed_params, *, tile_b=1024):
    """x: (B, 784) f32 -> (B*10,) f32 log-probabilities of the flattened logits."""
    w1p, b1p, w2p, b2p, w3p, b3p = packed_params
    B = x.shape[0]

    tb = _pick_tile_b(B, tile_b)
    num_tiles = -(-B // tb)                  # cdiv; last tile may be uneven (masked)

    w_bytes = (K_IN * H1 + H1 * H2_PAD + H2_PAD * OUT_PAD) * 2 + 3 * OUT_PAD * 4
    cost = pl.CostEstimate(
        flops=2 * B * (K_IN * H1 + H1 * H2_PAD + H2_PAD * OUT_PAD),
        transcendentals=B * OUT_PAD,
        bytes_accessed=B * K_IN * 4 + w_bytes + B * OUT_PAD * 4 + num_tiles * 8,
    )

    logits, tmax, tsum = pl.pallas_call(
        functools.partial(_mlp_logits_kernel, batch=B, tile_b=tb),
        grid=(num_tiles,),
        in_specs=[
            pl.BlockSpec((tb, K_IN), lambda i: (i, 0)),        # x: f32, tiled over batch
            pl.BlockSpec((K_IN, H1), lambda i: (0, 0)),        # weights: VMEM-resident
            pl.BlockSpec((1, H1), lambda i: (0, 0)),
            pl.BlockSpec((H1, H2_PAD), lambda i: (0, 0)),
            pl.BlockSpec((1, H2_PAD), lambda i: (0, 0)),
            pl.BlockSpec((H2_PAD, OUT_PAD), lambda i: (0, 0)),
            pl.BlockSpec((1, OUT_PAD), lambda i: (0, 0)),
        ],
        out_specs=[
            pl.BlockSpec((tb, OUT_PAD), lambda i: (i, 0)),     # lane-dense logits
            pl.BlockSpec((1, 1, 1), lambda i: (i, 0, 0)),      # per-tile max
            pl.BlockSpec((1, 1, 1), lambda i: (i, 0, 0)),      # per-tile sum-exp
        ],
        out_shape=[
            jax.ShapeDtypeStruct((B, OUT_PAD), jnp.float32),
            jax.ShapeDtypeStruct((num_tiles, 1, 1), jnp.float32),
            jax.ShapeDtypeStruct((num_tiles, 1, 1), jnp.float32),
        ],
        compiler_params=pltpu.CompilerParams(dimension_semantics=("parallel",)),
        cost_estimate=cost,
    )(x, w1p, b1p, w2p, b2p, w3p, b3p)

    # Global logsumexp combine + normalize + torch.flatten: tiny, fused XLA
    # epilogue (no second full-logits HBM round trip through a Pallas pass).
    m = jnp.max(tmax)
    lse = m + jnp.log(jnp.sum(tsum * jnp.exp(tmax - m)))
    return (logits[:, :OUT] - lse).reshape(-1)


def init_params(key):
    """Deterministic PyTorch-style Linear init: U(-1/sqrt(fan_in), 1/sqrt(fan_in))."""
    def linear(k, fan_in, fan_out):
        kw, kb = jax.random.split(k)
        bound = 1.0 / jnp.sqrt(jnp.float32(fan_in))
        w = jax.random.uniform(kw, (fan_in, fan_out), jnp.float32, -bound, bound)
        b = jax.random.uniform(kb, (fan_out,), jnp.float32, -bound, bound)
        return w, b

    k1, k2, k3 = jax.random.split(key, 3)
    w1, b1 = linear(k1, K_IN, H1)
    w2, b2 = linear(k2, H1, H2)
    w3, b3 = linear(k3, H2, OUT)
    return w1, b1, w2, b2, w3, b3


def reference(x, params):
    """Pure-JAX reference with matching bf16-weight / f32-accumulate numerics."""
    w1, b1, w2, b2, w3, b3 = params

    def lin(a, w, b):
        y = jnp.dot(a.astype(jnp.bfloat16), w.astype(jnp.bfloat16),
                    preferred_element_type=jnp.float32) + b
        return jnp.maximum(y, 0.0)

    h = lin(x, w1, b1)
    h = lin(h, w2, b2)
    h = lin(h, w3, b3)
    return jax.nn.log_softmax(h.reshape(-1), axis=0)


if __name__ == "__main__":
    key = jax.random.PRNGKey(0)
    kx, kp = jax.random.split(key)

    B = 12                                  # small demo batch (not a tile multiple)
    x = jax.random.normal(kx, (B, K_IN), dtype=jnp.float32)
    params = init_params(kp)
    packed = pack_params(params)

    out = forward(x, packed, tile_b=8)      # 2 batch tiles; uneven last tile exercises masking
    out = jax.block_until_ready(out)

    assert out.shape == (B * OUT,)
    assert out.dtype == jnp.float32
    # log_softmax sanity: logsumexp of the output is 0.
    assert jnp.allclose(jax.scipy.special.logsumexp(out), 0.0, atol=1e-4)
    # Matches the pure-JAX reference with the same bf16-weight numerics.
    ref = reference(x, params)
    assert jnp.allclose(out, ref, atol=5e-3, rtol=5e-3)

    print("KERNEL_OK")
</pallas_src>

<mosaic_0001>
module attributes {stable_mosaic.version = 11 : i64} {
  func.func @_mlp_logits_kernel(%arg0: i32, %arg1: memref<8x784xf32, #tpu.memory_space<vmem>>, %arg2: memref<784x128xbf16, #tpu.memory_space<vmem>>, %arg3: memref<1x128xf32, #tpu.memory_space<vmem>>, %arg4: memref<128x128xbf16, #tpu.memory_space<vmem>>, %arg5: memref<1x128xf32, #tpu.memory_space<vmem>>, %arg6: memref<128x128xbf16, #tpu.memory_space<vmem>>, %arg7: memref<1x128xf32, #tpu.memory_space<vmem>>, %arg8: memref<8x128xf32, #tpu.memory_space<vmem>>, %arg9: memref<1x1x1xf32, #tpu.memory_space<vmem>>, %arg10: memref<1x1x1xf32, #tpu.memory_space<vmem>>) attributes {dimension_semantics = [#tpu.dimension_semantics<parallel>], iteration_bounds = array<i64: 2>, scalar_prefetch = 0 : i64, scratch_operands = 0 : i64, tpu.core_type = #tpu.core_type<tc>, window_params = [{transform_indices = @transform_0, window_bounds = array<i64: 8, 784>}, {pipeline_mode = #tpu.pipeline_mode<synchronous>, transform_indices = @transform_1, window_bounds = array<i64: 784, 128>}, {pipeline_mode = #tpu.pipeline_mode<synchronous>, transform_indices = @transform_2, window_bounds = array<i64: 1, 128>}, {pipeline_mode = #tpu.pipeline_mode<synchronous>, transform_indices = @transform_3, window_bounds = array<i64: 128, 128>}, {pipeline_mode = #tpu.pipeline_mode<synchronous>, transform_indices = @transform_4, window_bounds = array<i64: 1, 128>}, {pipeline_mode = #tpu.pipeline_mode<synchronous>, transform_indices = @transform_5, window_bounds = array<i64: 128, 128>}, {pipeline_mode = #tpu.pipeline_mode<synchronous>, transform_indices = @transform_6, window_bounds = array<i64: 1, 128>}, {transform_indices = @transform_7, window_bounds = array<i64: 8, 128>}, {transform_indices = @transform_8, window_bounds = array<i64: 1, 1, 1>}, {transform_indices = @transform_9, window_bounds = array<i64: 1, 1, 1>}]} {
    %c0 = arith.constant 0 : index
    %c0_0 = arith.constant 0 : index
    %0 = vector.load %arg1[%c0, %c0_0] : memref<8x784xf32, #tpu.memory_space<vmem>>, vector<8x784xf32>
    %1 = arith.truncf %0 : vector<8x784xf32> to vector<8x784xbf16>
    %c0_1 = arith.constant 0 : index
    %c0_2 = arith.constant 0 : index
    %2 = vector.load %arg2[%c0_1, %c0_2] : memref<784x128xbf16, #tpu.memory_space<vmem>>, vector<784x128xbf16>
    %cst = arith.constant dense<0.000000e+00> : vector<8x128xf32>
    %3 = tpu.matmul %1, %2, %cst {dimension_numbers = #tpu.dot_dimension_numbers<[1], [0], [0], [1], [0, 0, 1, 1], [], []>} : vector<8x784xbf16>, vector<784x128xbf16>, vector<8x128xf32> -> vector<8x128xf32>
    %c0_3 = arith.constant 0 : index
    %c0_4 = arith.constant 0 : index
    %4 = vector.load %arg3[%c0_3, %c0_4] : memref<1x128xf32, #tpu.memory_space<vmem>>, vector<1x128xf32>
    %5 = vector.broadcast %4 : vector<1x128xf32> to vector<8x128xf32>
    %6 = arith.addf %3, %5 : vector<8x128xf32>
    %cst_5 = arith.constant 0.000000e+00 : f32
    %7 = vector.broadcast %cst_5 : f32 to vector<8x128xf32>
    %8 = arith.maximumf %6, %7 : vector<8x128xf32>
    %9 = arith.truncf %8 : vector<8x128xf32> to vector<8x128xbf16>
    %c0_6 = arith.constant 0 : index
    %c0_7 = arith.constant 0 : index
    %10 = vector.load %arg4[%c0_6, %c0_7] : memref<128x128xbf16, #tpu.memory_space<vmem>>, vector<128x128xbf16>
    %cst_8 = arith.constant dense<0.000000e+00> : vector<8x128xf32>
    %11 = tpu.matmul %9, %10, %cst_8 {dimension_numbers = #tpu.dot_dimension_numbers<[1], [0], [0], [1], [0, 0, 1, 1], [], []>} : vector<8x128xbf16>, vector<128x128xbf16>, vector<8x128xf32> -> vector<8x128xf32>
    %c0_9 = arith.constant 0 : index
    %c0_10 = arith.constant 0 : index
    %12 = vector.load %arg5[%c0_9, %c0_10] : memref<1x128xf32, #tpu.memory_space<vmem>>, vector<1x128xf32>
    %13 = vector.broadcast %12 : vector<1x128xf32> to vector<8x128xf32>
    %14 = arith.addf %11, %13 : vector<8x128xf32>
    %cst_11 = arith.constant 0.000000e+00 : f32
    %15 = vector.broadcast %cst_11 : f32 to vector<8x128xf32>
    %16 = arith.maximumf %14, %15 : vector<8x128xf32>
    %17 = arith.truncf %16 : vector<8x128xf32> to vector<8x128xbf16>
    %c0_12 = arith.constant 0 : index
    %c0_13 = arith.constant 0 : index
    %18 = vector.load %arg6[%c0_12, %c0_13] : memref<128x128xbf16, #tpu.memory_space<vmem>>, vector<128x128xbf16>
    %cst_14 = arith.constant dense<0.000000e+00> : vector<8x128xf32>
    %19 = tpu.matmul %17, %18, %cst_14 {dimension_numbers = #tpu.dot_dimension_numbers<[1], [0], [0], [1], [0, 0, 1, 1], [], []>} : vector<8x128xbf16>, vector<128x128xbf16>, vector<8x128xf32> -> vector<8x128xf32>
    %c0_15 = arith.constant 0 : index
    %c0_16 = arith.constant 0 : index
    %20 = vector.load %arg7[%c0_15, %c0_16] : memref<1x128xf32, #tpu.memory_space<vmem>>, vector<1x128xf32>
    %21 = vector.broadcast %20 : vector<1x128xf32> to vector<8x128xf32>
    %22 = arith.addf %19, %21 : vector<8x128xf32>
    %cst_17 = arith.constant 0.000000e+00 : f32
    %23 = vector.broadcast %cst_17 : f32 to vector<8x128xf32>
    %24 = arith.maximumf %22, %23 : vector<8x128xf32>
    %c0_18 = arith.constant 0 : index
    %c0_19 = arith.constant 0 : index
    %25 = vector.load %arg8[%c0_18, %c0_19] : memref<8x128xf32, #tpu.memory_space<vmem>>, vector<8x128xf32>
    tpu.vector_store %arg8[%c0_18, %c0_19], %24 {strides = array<i32>} : memref<8x128xf32, #tpu.memory_space<vmem>>, vector<8x128xf32>,
    %26 = tpu.iota {dimensions = array<i32: 1>} : vector<8x128xi32>
    %27 = tpu.iota {dimensions = array<i32: 0>} : vector<8x128xi32>
    %c8_i32 = arith.constant 8 : i32
    %28 = arith.muli %arg0, %c8_i32 : i32
    %29 = vector.broadcast %28 : i32 to vector<8x128xi32>
    %30 = arith.addi %27, %29 : vector<8x128xi32>
    %c10_i32 = arith.constant 10 : i32
    %31 = vector.broadcast %c10_i32 : i32 to vector<8x128xi32>
    %32 = arith.cmpi slt, %26, %31 : vector<8x128xi32>
    %c12_i32 = arith.constant 12 : i32
    %33 = vector.broadcast %c12_i32 : i32 to vector<8x128xi32>
    %34 = arith.cmpi slt, %30, %33 : vector<8x128xi32>
    %35 = arith.andi %32, %34 : vector<8x128xi1>
    %cst_20 = arith.constant 0xFF800000 : f32
    %36 = vector.broadcast %cst_20 : f32 to vector<8x128xf32>
    %37 = arith.select %35, %24, %36 : vector<8x128xi1>, vector<8x128xf32>
    %38 = vector.shape_cast %37 : vector<8x128xf32> to vector<1x8x128xf32>
    %cst_21 = arith.constant dense<0xFF800000> : vector<1xf32>
    %39 = vector.multi_reduction <maximumf>, %38, %cst_21 [1, 2] : vector<1x8x128xf32> to vector<1xf32>
    %40 = vector.shape_cast %39 : vector<1xf32> to vector<1x1x1xf32>
    %41 = vector.extract %40[0, 0, 0] : f32 from vector<1x1x1xf32>
    %42 = vector.broadcast %41 : f32 to vector<8x128xf32>
    %43 = arith.subf %37, %42 : vector<8x128xf32>
    %44 = math.exp %43 : vector<8x128xf32>
    %cst_22 = arith.constant 0.000000e+00 : f32
    %45 = vector.broadcast %cst_22 : f32 to vector<8x128xf32>
    %46 = arith.select %35, %44, %45 : vector<8x128xi1>, vector<8x128xf32>
    %47 = vector.shape_cast %46 : vector<8x128xf32> to vector<1x8x128xf32>
    %cst_23 = arith.constant dense<0.000000e+00> : vector<1xf32>
    %48 = vector.multi_reduction <add>, %47, %cst_23 [1, 2] : vector<1x8x128xf32> to vector<1xf32>
    %49 = vector.shape_cast %48 : vector<1xf32> to vector<1x1x1xf32>
    %50 = vector.extract %49[0, 0, 0] : f32 from vector<1x1x1xf32>
    %51 = vector.broadcast %41 : f32 to vector<1x1x1xf32>
    %c0_24 = arith.constant 0 : index
    %c0_25 = arith.constant 0 : index
    %c0_26 = arith.constant 0 : index
    %52 = vector.load %arg9[%c0_24, %c0_25, %c0_26] : memref<1x1x1xf32, #tpu.memory_space<vmem>>, vector<1x1x1xf32>
    tpu.vector_store %arg9[%c0_24, %c0_25, %c0_26], %51 {strides = array<i32>} : memref<1x1x1xf32, #tpu.memory_space<vmem>>, vector<1x1x1xf32>,
    %53 = vector.broadcast %50 : f32 to vector<1x1x1xf32>
    %c0_27 = arith.constant 0 : index
    %c0_28 = arith.constant 0 : index
    %c0_29 = arith.constant 0 : index
    %54 = vector.load %arg10[%c0_27, %c0_28, %c0_29] : memref<1x1x1xf32, #tpu.memory_space<vmem>>, vector<1x1x1xf32>
    tpu.vector_store %arg10[%c0_27, %c0_28, %c0_29], %53 {strides = array<i32>} : memref<1x1x1xf32, #tpu.memory_space<vmem>>, vector<1x1x1xf32>,
    return
  }
  func.func @transform_0(%arg0: i32) -> (i32, i32) {
    %c0_i32 = arith.constant 0 : i32
    %c0_i32_0 = arith.constant 0 : i32
    return %arg0, %c0_i32 : i32, i32
  }
  func.func @transform_1(%arg0: i32) -> (i32, i32) {
    %c0_i32 = arith.constant 0 : i32
    %c0_i32_0 = arith.constant 0 : i32
    %c0_i32_1 = arith.constant 0 : i32
    return %c0_i32, %c0_i32_0 : i32, i32
  }
  func.func @transform_2(%arg0: i32) -> (i32, i32) {
    %c0_i32 = arith.constant 0 : i32
    %c0_i32_0 = arith.constant 0 : i32
    %c0_i32_1 = arith.constant 0 : i32
    return %c0_i32, %c0_i32_0 : i32, i32
  }
  func.func @transform_3(%arg0: i32) -> (i32, i32) {
    %c0_i32 = arith.constant 0 : i32
    %c0_i32_0 = arith.constant 0 : i32
    %c0_i32_1 = arith.constant 0 : i32
    return %c0_i32, %c0_i32_0 : i32, i32
  }
  func.func @transform_4(%arg0: i32) -> (i32, i32) {
    %c0_i32 = arith.constant 0 : i32
    %c0_i32_0 = arith.constant 0 : i32
    %c0_i32_1 = arith.constant 0 : i32
    return %c0_i32, %c0_i32_0 : i32, i32
  }
  func.func @transform_5(%arg0: i32) -> (i32, i32) {
    %c0_i32 = arith.constant 0 : i32
    %c0_i32_0 = arith.constant 0 : i32
    %c0_i32_1 = arith.constant 0 : i32
    return %c0_i32, %c0_i32_0 : i32, i32
  }
  func.func @transform_6(%arg0: i32) -> (i32, i32) {
    %c0_i32 = arith.constant 0 : i32
    %c0_i32_0 = arith.constant 0 : i32
    %c0_i32_1 = arith.constant 0 : i32
    return %c0_i32, %c0_i32_0 : i32, i32
  }
  func.func @transform_7(%arg0: i32) -> (i32, i32) {
    %c0_i32 = arith.constant 0 : i32
    %c0_i32_0 = arith.constant 0 : i32
    return %arg0, %c0_i32 : i32, i32
  }
  func.func @transform_8(%arg0: i32) -> (i32, i32, i32) {
    %c0_i32 = arith.constant 0 : i32
    %c0_i32_0 = arith.constant 0 : i32
    %c0_i32_1 = arith.constant 0 : i32
    return %arg0, %c0_i32, %c0_i32_0 : i32, i32, i32
  }
  func.func @transform_9(%arg0: i32) -> (i32, i32, i32) {
    %c0_i32 = arith.constant 0 : i32
    %c0_i32_0 = arith.constant 0 : i32
    %c0_i32_1 = arith.constant 0 : i32
    return %arg0, %c0_i32, %c0_i32_0 : i32, i32, i32
  }
}

</mosaic_0001>

<llo_original>
// kernel: forward.1
$region0: #{forward.1}
  #allocation0 [shape = 'u32[]', space=smem, size = 0x4, offset = 0x4, fixed_abs, tag = 'smem constant byte address 0x4 - core index']
  #allocation1 [shape = 'u32[144,128]{1,0:T(1,128)}', space=vmem, size = 0x12000, scoped, tag = 'internal scratch']
  %s0 = inlined_call_operand.hbm [shape: f32[12,784], index: 0, kind: input, shape index: {}]
  %s1 = inlined_call_operand.hbm [shape: bf16[784,128], index: 1, kind: input, shape index: {}]
  %s2 = inlined_call_operand.vmem [shape: f32[1,128], index: 2, kind: input, shape index: {}]
  %s3 = inlined_call_operand.hbm [shape: bf16[128,128], index: 3, kind: input, shape index: {}]
  %s4 = inlined_call_operand.vmem [shape: f32[1,128], index: 4, kind: input, shape index: {}]
  %s5 = inlined_call_operand.hbm [shape: bf16[128,128], index: 5, kind: input, shape index: {}]
  %s6 = inlined_call_operand.vmem [shape: f32[1,128], index: 6, kind: input, shape index: {}]
  %s7 = inlined_call_operand.vmem [shape: f32[12,128], index: 7, kind: output, shape index: {0}]
  %s8 = inlined_call_operand.vmem [shape: f32[2,1,1], index: 8, kind: output, shape index: {1}]
  %s9 = inlined_call_operand.vmem [shape: f32[2,1,1], index: 9, kind: output, shape index: {2}]
  %10 = xla_tuple %s7, %s8, %s9
  %s11 = sld [smem:[#allocation0]]
  $region93: #{forward.1} parent=0
    _
  %s13 = ssub.s32 1, %s11
  %s14 = scalar_select 0, %s13, %s11
  $region1: #{forward.1} parent=0
    #allocation2 [shape = 'u8[57344]{0}', space=vmem, size = 0xe000, scoped, tag = 'input window, operand 0']
    #allocation3 [shape = 's32[2]{0}', space=sflag, size = 0x8, scoped, tag = 'scoped memory for forward.1']
    #allocation4 [shape = 'u8[200704]{0}', space=vmem, size = 0x31000, scoped, tag = 'input window, operand 1, single buffered']
    #allocation5 [shape = 's32[1]{0}', space=sflag, size = 0x4, scoped, tag = 'scoped memory for forward.1']
    #allocation6 [shape = 'u8[32768]{0}', space=vmem, size = 0x8000, scoped, tag = 'input window, operand 3, single buffered']
    #allocation7 [shape = 'u8[32768]{0}', space=vmem, size = 0x8000, scoped, tag = 'input window, operand 5, single buffered']
    #allocation8 [shape = 's32[1]{0}', space=sflag, size = 0x4, scoped, tag = 'scoped memory for forward.1']
    %15 = vsyncpa [#allocation3], 0
    %s16 = scalar_lea.sflag [#allocation3], 1
    %17 = vsyncpa %s16, 0
    %18 = vsyncpa [#allocation5], 0
    %19 = vsyncpa [#allocation8], 0
    loop: start=0, step=1, limit=4
    $region2: #{forward.1} parent=1 // loop_pre_header
      _
    $region3: #{forward.1} parent=1 // loop_header
      %s21 = sphi 0, %s25
      %p22 = scmp.ge.s32.totalorder %s21, 4
      %s31 = sphi 0, %s33
      %s34 = sphi 0, %s31
      %s35 = sphi 0, %s34
      %s51 = sphi 0, %s35
      %s55 = sphi 0, %s55
      %s57 = sphi 0, %s55
      %s58 = sphi 0, %s57
      %s72 = sphi 0, %s58
      %s76 = sphi 0, %s76
      %s78 = sphi 0, %s76
      %s79 = sphi 0, %s78
      %s93 = sphi 0, %s79
      %s97 = sphi 0, %s97
      %s99 = sphi 0, %s97
      %s100 = sphi 0, %s99
      %s114 = sphi 0, %s100
      %s118 = sphi 0, %s118
      %s120 = sphi 0, %s118
      %s121 = sphi 0, %s120
      %s135 = sphi 0, %s121
      %s139 = sphi 0, %s139
      %s141 = sphi 0, %s139
      %s142 = sphi 0, %s141
      %s156 = sphi 0, %s142
      %s160 = sphi 0, %s160
      %s162 = sphi 0, %s160
      %s163 = sphi 0, %s162
      %s177 = sphi 0, %s163
      %s183 = sphi 0, %s185
      %s186 = sphi 0, %s183
      %s187 = sphi 0, %s186
      %s203 = sphi 0, %s187
      %s209 = sphi 0, %s211
      %s212 = sphi 0, %s209
      %s213 = sphi 0, %s212
      %s229 = sphi 0, %s213
      %s235 = sphi 0, %s237
      %s238 = sphi 0, %s235
      %s239 = sphi 0, %s238
      %s255 = sphi 0, %s239
    $region4: #{forward.1} parent=1 // loop_header_branch
      %24 = sbr.rel (%p22) target = $region8
    $region5: #{forward.1} parent=1 // loop_body
      %s26 = ssub.s32 %s21, 1
      %s27 = ssub.s32 %s21, 2
      %s28 = sadd.s32 %s21, 1
      %s29 = ssub.s32 %s21, %s28
      %p30 = scmp.eq.s32.totalorder %s29, 0
      %s32 = sadd.s32 %s31, 1
      %s33 = scalar_select %p30, %s31, %s32
      %p36 = pneg %p30
      %p37 = scmp.eq.s32.totalorder %s21, 1
      %p38 = por %p36, %p37
      %p39 = scmp.ne.s32.totalorder %s31, %s34
      %p40 = scmp.eq.s32.totalorder %s21, 0
      %p41 = por %p39, %p40
      %p42 = scmp.ne.s32.totalorder %s31, %s34
      %p43 = scmp.eq.s32.totalorder %s26, 1
      %p44 = por %p42, %p43
      %p45 = scmp.ne.s32.totalorder %s34, %s35
      %p46 = scmp.eq.s32.totalorder %s26, 0
      %p47 = por %p45, %p46
      %p48 = scmp.ne.s32.totalorder %s34, %s35
      %p49 = scmp.eq.s32.totalorder %s27, 1
      %p50 = por %p48, %p49
      %p52 = scmp.ne.s32.totalorder %s35, %s51
      %p53 = scmp.eq.s32.totalorder %s27, 0
      %p54 = por %p52, %p53
      %s56 = sadd.s32 %s55, 1
      %p59 = scmp.eq.s32.totalorder %s21, 1
      %p60 = scmp.ne.s32.totalorder %s55, %s57
      %p61 = scmp.eq.s32.totalorder %s21, 0
      %p62 = por %p60, %p61
      %p63 = scmp.ne.s32.totalorder %s55, %s57
      %p64 = scmp.eq.s32.totalorder %s26, 1
      %p65 = por %p63, %p64
      %p66 = scmp.ne.s32.totalorder %s57, %s58
      %p67 = scmp.eq.s32.totalorder %s26, 0
      %p68 = por %p66, %p67
      %p69 = scmp.ne.s32.totalorder %s57, %s58
      %p70 = scmp.eq.s32.totalorder %s27, 1
      %p71 = por %p69, %p70
      %p73 = scmp.ne.s32.totalorder %s58, %s72
      %p74 = scmp.eq.s32.totalorder %s27, 0
      %p75 = por %p73, %p74
      %s77 = sadd.s32 %s76, 1
      %p80 = scmp.eq.s32.totalorder %s21, 1
      %p81 = scmp.ne.s32.totalorder %s76, %s78
      %p82 = scmp.eq.s32.totalorder %s21, 0
      %p83 = por %p81, %p82
      %p84 = scmp.ne.s32.totalorder %s76, %s78
      %p85 = scmp.eq.s32.totalorder %s26, 1
      %p86 = por %p84, %p85
      %p87 = scmp.ne.s32.totalorder %s78, %s79
      %p88 = scmp.eq.s32.totalorder %s26, 0
      %p89 = por %p87, %p88
      %p90 = scmp.ne.s32.totalorder %s78, %s79
      %p91 = scmp.eq.s32.totalorder %s27, 1
      %p92 = por %p90, %p91
      %p94 = scmp.ne.s32.totalorder %s79, %s93
      %p95 = scmp.eq.s32.totalorder %s27, 0
      %p96 = por %p94, %p95
      %s98 = sadd.s32 %s97, 1
      %p101 = scmp.eq.s32.totalorder %s21, 1
      %p102 = scmp.ne.s32.totalorder %s97, %s99
      %p103 = scmp.eq.s32.totalorder %s21, 0
      %p104 = por %p102, %p103
      %p105 = scmp.ne.s32.totalorder %s97, %s99
      %p106 = scmp.eq.s32.totalorder %s26, 1
      %p107 = por %p105, %p106
      %p108 = scmp.ne.s32.totalorder %s99, %s100
      %p109 = scmp.eq.s32.totalorder %s26, 0
      %p110 = por %p108, %p109
      %p111 = scmp.ne.s32.totalorder %s99, %s100
      %p112 = scmp.eq.s32.totalorder %s27, 1
      %p113 = por %p111, %p112
      %p115 = scmp.ne.s32.totalorder %s100, %s114
      %p116 = scmp.eq.s32.totalorder %s27, 0
      %p117 = por %p115, %p116
      %s119 = sadd.s32 %s118, 1
      %p122 = scmp.eq.s32.totalorder %s21, 1
      %p123 = scmp.ne.s32.totalorder %s118, %s120
      %p124 = scmp.eq.s32.totalorder %s21, 0
      %p125 = por %p123, %p124
      %p126 = scmp.ne.s32.totalorder %s118, %s120
      %p127 = scmp.eq.s32.totalorder %s26, 1
      %p128 = por %p126, %p127
      %p129 = scmp.ne.s32.totalorder %s120, %s121
      %p130 = scmp.eq.s32.totalorder %s26, 0
      %p131 = por %p129, %p130
      %p132 = scmp.ne.s32.totalorder %s120, %s121
      %p133 = scmp.eq.s32.totalorder %s27, 1
      %p134 = por %p132, %p133
      %p136 = scmp.ne.s32.totalorder %s121, %s135
      %p137 = scmp.eq.s32.totalorder %s27, 0
      %p138 = por %p136, %p137
      %s140 = sadd.s32 %s139, 1
      %p143 = scmp.eq.s32.totalorder %s21, 1
      %p144 = scmp.ne.s32.totalorder %s139, %s141
      %p145 = scmp.eq.s32.totalorder %s21, 0
      %p146 = por %p144, %p145
      %p147 = scmp.ne.s32.totalorder %s139, %s141
      %p148 = scmp.eq.s32.totalorder %s26, 1
      %p149 = por %p147, %p148
      %p150 = scmp.ne.s32.totalorder %s141, %s142
      %p151 = scmp.eq.s32.totalorder %s26, 0
      %p152 = por %p150, %p151
      %p153 = scmp.ne.s32.totalorder %s141, %s142
      %p154 = scmp.eq.s32.totalorder %s27, 1
      %p155 = por %p153, %p154
      %p157 = scmp.ne.s32.totalorder %s142, %s156
      %p158 = scmp.eq.s32.totalorder %s27, 0
      %p159 = por %p157, %p158
      %s161 = sadd.s32 %s160, 1
      %p164 = scmp.eq.s32.totalorder %s21, 1
      %p165 = scmp.ne.s32.totalorder %s160, %s162
      %p166 = scmp.eq.s32.totalorder %s21, 0
      %p167 = por %p165, %p166
      %p168 = scmp.ne.s32.totalorder %s160, %s162
      %p169 = scmp.eq.s32.totalorder %s26, 1
      %p170 = por %p168, %p169
      %p171 = scmp.ne.s32.totalorder %s162, %s163
      %p172 = scmp.eq.s32.totalorder %s26, 0
      %p173 = por %p171, %p172
      %p174 = scmp.ne.s32.totalorder %s162, %s163
      %p175 = scmp.eq.s32.totalorder %s27, 1
      %p176 = por %p174, %p175
      %p178 = scmp.ne.s32.totalorder %s163, %s177
      %p179 = scmp.eq.s32.totalorder %s27, 0
      %p180 = por %p178, %p179
      %s181 = ssub.s32 %s21, %s28
      %p182 = scmp.eq.s32.totalorder %s181, 0
      %s184 = sadd.s32 %s183, 1
      %s185 = scalar_select %p182, %s183, %s184
      %p188 = pneg %p182
      %p189 = scmp.eq.s32.totalorder %s21, 1
      %p190 = por %p188, %p189
      %p191 = scmp.ne.s32.totalorder %s183, %s186
      %p192 = scmp.eq.s32.totalorder %s21, 0
      %p193 = por %p191, %p192
      %p194 = scmp.ne.s32.totalorder %s183, %s186
      %p195 = scmp.eq.s32.totalorder %s26, 1
      %p196 = por %p194, %p195
      %p197 = scmp.ne.s32.totalorder %s186, %s187
      %p198 = scmp.eq.s32.totalorder %s26, 0
      %p199 = por %p197, %p198
      %p200 = scmp.ne.s32.totalorder %s186, %s187
      %p201 = scmp.eq.s32.totalorder %s27, 1
      %p202 = por %p200, %p201
      %p204 = scmp.ne.s32.totalorder %s187, %s203
      %p205 = scmp.eq.s32.totalorder %s27, 0
      %p206 = por %p204, %p205
      %s207 = ssub.s32 %s21, %s28
      %p208 = scmp.eq.s32.totalorder %s207, 0
      %s210 = sadd.s32 %s209, 1
      %s211 = scalar_select %p208, %s209, %s210
      %p214 = pneg %p208
      %p215 = scmp.eq.s32.totalorder %s21, 1
      %p216 = por %p214, %p215
      %p217 = scmp.ne.s32.totalorder %s209, %s212
      %p218 = scmp.eq.s32.totalorder %s21, 0
      %p219 = por %p217, %p218
      %p220 = scmp.ne.s32.totalorder %s209, %s212
      %p221 = scmp.eq.s32.totalorder %s26, 1
      %p222 = por %p220, %p221
      %p223 = scmp.ne.s32.totalorder %s212, %s213
      %p224 = scmp.eq.s32.totalorder %s26, 0
      %p225 = por %p223, %p224
      %p226 = scmp.ne.s32.totalorder %s212, %s213
      %p227 = scmp.eq.s32.totalorder %s27, 1
      %p228 = por %p226, %p227
      %p230 = scmp.ne.s32.totalorder %s213, %s229
      %p231 = scmp.eq.s32.totalorder %s27, 0
      %p232 = por %p230, %p231
      %s233 = ssub.s32 %s21, %s28
      %p234 = scmp.eq.s32.totalorder %s233, 0
      %s236 = sadd.s32 %s235, 1
      %s237 = scalar_select %p234, %s235, %s236
      %p240 = pneg %p234
      %p241 = scmp.eq.s32.totalorder %s21, 1
      %p242 = por %p240, %p241
      %p243 = scmp.ne.s32.totalorder %s235, %s238
      %p244 = scmp.eq.s32.totalorder %s21, 0
      %p245 = por %p243, %p244
      %p246 = scmp.ne.s32.totalorder %s235, %s238
      %p247 = scmp.eq.s32.totalorder %s26, 1
      %p248 = por %p246, %p247
      %p249 = scmp.ne.s32.totalorder %s238, %s239
      %p250 = scmp.eq.s32.totalorder %s26, 0
      %p251 = por %p249, %p250
      %p252 = scmp.ne.s32.totalorder %s238, %s239
      %p253 = scmp.eq.s32.totalorder %s27, 1
      %p254 = por %p252, %p253
      %p256 = scmp.ne.s32.totalorder %s239, %s255
      %p257 = scmp.eq.s32.totalorder %s27, 0
      %p258 = por %p256, %p257
      %p259 = scmp.le.s32.totalorder 1, %s21
      %p260 = scmp.lt.s32.totalorder %s21, 3
      %p261 = pnand %p259, %p260
      %p262 = pneg %p261
      // Predicated region
      $region9: #{forward.1} parent=5 // pred_check
        _
      $region10: #{forward.1} parent=5 // pred_check_branch
        %264 = sbr.rel (%p261) target = $region12
      $region11: #{forward.1} parent=5 // pred_region
        %s265 = ssub.s32 %s21, 1
        // Predicated region
        $region13: #{forward.1} parent=11 // pred_check
          %p266 = pneg %p68
        $region14: #{forward.1} parent=11 // pred_check_branch
          %268 = sbr.rel (%p266) target = $region16
        $region15: #{forward.1} parent=11 // pred_region
          %s270 = ssub.s32 6272, 6272
          %271 = vsyncadd [#allocation5], %s270
          %s272 = sshll.u32 [#allocation4], 4
          %s273 = int_to_ptr.vmem [resolvable:$true] %s272
          %278 = dma.hbm_to_vmem [thread:$0]  %s1, 6272, %s273, [#allocation5], 64, 64, 4
        $region16: #{forward.1} parent=11 // pred_fallthru
          _
        // Predicated region
        $region17: #{forward.1} parent=11 // pred_check
          %p279 = pneg %p89
        $region18: #{forward.1} parent=11 // pred_check_branch
          %281 = sbr.rel (%p279) target = $region20
        $region19: #{forward.1} parent=11 // pred_region
          _
        $region20: #{forward.1} parent=11 // pred_fallthru
          _
        // Predicated region
        $region21: #{forward.1} parent=11 // pred_check
          %p282 = pneg %p110
        $region22: #{forward.1} parent=11 // pred_check_branch
          %284 = sbr.rel (%p282) target = $region24
        $region23: #{forward.1} parent=11 // pred_region
          %s286 = ssub.s32 1024, 1024
          %287 = vsyncadd [#allocation5], %s286
          %s288 = sshll.u32 [#allocation6], 4
          %s289 = int_to_ptr.vmem [resolvable:$true] %s288
          %294 = dma.hbm_to_vmem [thread:$0]  %s3, 1024, %s289, [#allocation5], 64, 64, 4
        $region24: #{forward.1} parent=11 // pred_fallthru
          _
        // Predicated region
        $region25: #{forward.1} parent=11 // pred_check
          %p295 = pneg %p131
        $region26: #{forward.1} parent=11 // pred_check_branch
          %297 = sbr.rel (%p295) target = $region28
        $region27: #{forward.1} parent=11 // pred_region
          _
        $region28: #{forward.1} parent=11 // pred_fallthru
          _
        // Predicated region
        $region29: #{forward.1} parent=11 // pred_check
          %p298 = pneg %p152
        $region30: #{forward.1} parent=11 // pred_check_branch
          %300 = sbr.rel (%p298) target = $region32
        $region31: #{forward.1} parent=11 // pred_region
          %s302 = ssub.s32 1024, 1024
          %303 = vsyncadd [#allocation8], %s302
          %s304 = sshll.u32 [#allocation7], 4
          %s305 = int_to_ptr.vmem [resolvable:$true] %s304
          %310 = dma.hbm_to_vmem [thread:$0]  %s5, 1024, %s305, [#allocation8], 64, 64, 4
        $region32: #{forward.1} parent=11 // pred_fallthru
          _
        // Predicated region
        $region33: #{forward.1} parent=11 // pred_check
          %p311 = pneg %p173
        $region34: #{forward.1} parent=11 // pred_check_branch
          %313 = sbr.rel (%p311) target = $region36
        $region35: #{forward.1} parent=11 // pred_region
          _
        $region36: #{forward.1} parent=11 // pred_fallthru
          _
      $region12: #{forward.1} parent=5 // pred_fallthru
        _
      %p314 = scmp.lt.s32.totalorder %s21, 2
      // Predicated region
      $region37: #{forward.1} parent=5 // pred_check
        %p315 = pneg %p314
      $region38: #{forward.1} parent=5 // pred_check_branch
        %317 = sbr.rel (%p315) target = $region40
      $region39: #{forward.1} parent=5 // pred_region
        // Predicated region
        $region41: #{forward.1} parent=39 // pred_check
          %p318 = pneg %p41
        $region42: #{forward.1} parent=39 // pred_check_branch
          %320 = sbr.rel (%p318) target = $region44
        $region43: #{forward.1} parent=39 // pred_region
          %s321 = sand.u32 %s31, 1
          %s322 = scalar_lea.sflag [#allocation3], %s321
          %s323 = sand.u32 %s31, 1
          %s324 = smul.addr %s323, 56
          %s325 = scalar_lea.vmem [#allocation2], %s324
          %s327 = ssub.s32 896, 896
          %328 = vsyncadd %s322, %s327
          %s329 = smul.addr %s21, 7
          %s330 = smul.addr %s329, 128
          %s331 = scalar_lea.hbm %s0, %s330
          %s333 = sshll.u32 %s325, 4
          %s334 = int_to_ptr.vmem [resolvable:$true] %s333
          %336 = dma.hbm_to_vmem [thread:$0]  %s331, 896, %s334, %s322
        $region44: #{forward.1} parent=39 // pred_fallthru
          _
      $region40: #{forward.1} parent=5 // pred_fallthru
        _
      %p337 = scmp.le.s32.totalorder 1, %s21
      %p338 = scmp.lt.s32.totalorder %s21, 3
      %p339 = pnand %p337, %p338
      %p340 = pneg %p339
      // Predicated region
      $region45: #{forward.1} parent=5 // pred_check
        _
      $region46: #{forward.1} parent=5 // pred_check_branch
        %342 = sbr.rel (%p339) target = $region48
      $region47: #{forward.1} parent=5 // pred_region
        %s343 = ssub.s32 %s21, 1
        %s344 = sand.u32 %s34, 1
        %s345 = scalar_lea.sflag [#allocation3], %s344
        %s346 = sand.u32 %s34, 1
        %s347 = smul.addr %s346, 56
        %s348 = scalar_lea.vmem [#allocation2], %s347
        // Predicated region
        $region49: #{forward.1} parent=47 // pred_check
          %p349 = pneg %p47
        $region50: #{forward.1} parent=47 // pred_check_branch
          %351 = sbr.rel (%p349) target = $region52
        $region51: #{forward.1} parent=47 // pred_region
          %352 = dma.done %s345, 896
        $region52: #{forward.1} parent=47 // pred_fallthru
          _
        // Predicated region
        $region53: #{forward.1} parent=47 // pred_check
          %p353 = pneg %p68
        $region54: #{forward.1} parent=47 // pred_check_branch
          %355 = sbr.rel (%p353) target = $region56
        $region55: #{forward.1} parent=47 // pred_region
          %356 = dma.done [#allocation5], 6272
        $region56: #{forward.1} parent=47 // pred_fallthru
          _
        // Predicated region
        $region57: #{forward.1} parent=47 // pred_check
          %p357 = pneg %p110
        $region58: #{forward.1} parent=47 // pred_check_branch
          %359 = sbr.rel (%p357) target = $region60
        $region59: #{forward.1} parent=47 // pred_region
          %360 = dma.done [#allocation5], 1024
        $region60: #{forward.1} parent=47 // pred_fallthru
          _
        // Predicated region
        $region61: #{forward.1} parent=47 // pred_check
          %p361 = pneg %p152
        $region62: #{forward.1} parent=47 // pred_check_branch
          %363 = sbr.rel (%p361) target = $region64
        $region63: #{forward.1} parent=47 // pred_region
          %364 = dma.done [#allocation8], 1024
        $region64: #{forward.1} parent=47 // pred_fallthru
          _
        %s365 = sand.u32 %s34, 1
        %s366 = scalar_lea.sflag [#allocation3], %s365
        %s367 = sand.u32 %s34, 1
        %s368 = smul.addr %s367, 56
        %s369 = scalar_lea.vmem [#allocation2], %s368
        %p370 = pneg %p47
        %p371 = pneg %p44
        %p372 = pneg %p68
        %p373 = pneg %p65
        %p374 = pneg %p89
        %p375 = pneg %p86
        %p376 = pneg %p110
        %p377 = pneg %p107
        %p378 = pneg %p131
        %p379 = pneg %p128
        %p380 = pneg %p152
        %p381 = pneg %p149
        %p382 = pneg %p173
        %p383 = pneg %p170
        %p384 = pneg %p199
        %p385 = pneg %p196
        %p386 = scmp.lt.s32.totalorder %s26, 1
        %s387 = scalar_select %p386, %s26, 1
        %s388 = smul.addr %s387, 8
        %s389 = scalar_lea.vmem %s7, %s388
        %p390 = pneg %p225
        %p391 = pneg %p222
        %p392 = scmp.lt.s32.totalorder %s26, 1
        %s393 = scalar_select %p392, %s26, 1
        %s394 = scalar_lea.vmem %s8, %s393
        %p395 = pneg %p251
        %p396 = pneg %p248
        %p397 = scmp.lt.s32.totalorder %s26, 1
        %s398 = scalar_select %p397, %s26, 1
        %s399 = scalar_lea.vmem %s9, %s398
        %p400 = scmp.lt.s32.totalorder %s26, 1
        %s401 = scalar_select %p400, %s26, 1
        %s402 = smul.addr %s401, 8
        %s403 = scalar_lea.vmem %s7, %s402
        %p404 = scmp.lt.s32.totalorder %s26, 1
        %s405 = scalar_select %p404, %s26, 1
        %s406 = scalar_lea.vmem %s8, %s405
        %p407 = scmp.lt.s32.totalorder %s26, 1
        %s408 = scalar_select %p407, %s26, 1
        %s409 = scalar_lea.vmem %s9, %s408
        %v411 = vld [vmem:[%s348] sm:$0xff]
        %v412 = vld [vmem:[%s348 + $0x8] sm:$0xff]
        %v413 = vld [vmem:[%s348 + $0x10] sm:$0xff]
        %v414 = vld [vmem:[%s348 + $0x18] sm:$0xff]
        %v415 = vld [vmem:[%s348 + $0x20] sm:$0xff]
        %v416 = vld [vmem:[%s348 + $0x28] sm:$0xff]
        %v417 = vld [vmem:[%s348 + $0x30] sm:$0xff]
        %v418 = vpack.c.bf16 %v411, %v411
        %v419 = vpack.c.bf16 %v412, %v412
        %v420 = vpack.c.bf16 %v413, %v413
        %v421 = vpack.c.bf16 %v414, %v414
        %v422 = vpack.c.bf16 %v415, %v415
        %v423 = vpack.c.bf16 %v416, %v416
        %v424 = vpack.c.bf16 %v417, %v417
        %v425 = vld [vmem:[#allocation4] sm:$0xf]
        %v426 = vld [vmem:[#allocation4 + $0x4] sm:$0xf]
        %v427 = vld [vmem:[#allocation4 + $0x8] sm:$0xf]
        %v428 = vld [vmem:[#allocation4 + $0xc] sm:$0xf]
        %v429 = vld [vmem:[#allocation4 + $0x10] sm:$0xf]
        %v430 = vld [vmem:[#allocation4 + $0x14] sm:$0xf]
        %v431 = vld [vmem:[#allocation4 + $0x18] sm:$0xf]
        %v432 = vld [vmem:[#allocation4 + $0x1c] sm:$0xf]
        %v433 = vld [vmem:[#allocation4 + $0x20] sm:$0xf]
        %v434 = vld [vmem:[#allocation4 + $0x24] sm:$0xf]
        %v435 = vld [vmem:[#allocation4 + $0x28] sm:$0xf]
        %v436 = vld [vmem:[#allocation4 + $0x2c] sm:$0xf]
        %v437 = vld [vmem:[#allocation4 + $0x30] sm:$0xf]
        %v438 = vld [vmem:[#allocation4 + $0x34] sm:$0xf]
        %v439 = vld [vmem:[#allocation4 + $0x38] sm:$0xf]
        %v440 = vld [vmem:[#allocation4 + $0x3c] sm:$0xf]
        %v441 = vld [vmem:[#allocation4 + $0x40] sm:$0xf]
        %v442 = vld [vmem:[#allocation4 + $0x44] sm:$0xf]
        %v443 = vld [vmem:[#allocation4 + $0x48] sm:$0xf]
        %v444 = vld [vmem:[#allocation4 + $0x4c] sm:$0xf]
        %v445 = vld [vmem:[#allocation4 + $0x50] sm:$0xf]
        %v446 = vld [vmem:[#allocation4 + $0x54] sm:$0xf]
        %v447 = vld [vmem:[#allocation4 + $0x58] sm:$0xf]
        %v448 = vld [vmem:[#allocation4 + $0x5c] sm:$0xf]
        %v449 = vld [vmem:[#allocation4 + $0x60] sm:$0xf]
        %v450 = vld [vmem:[#allocation4 + $0x64] sm:$0xf]
        %v451 = vld [vmem:[#allocation4 + $0x68] sm:$0xf]
        %v452 = vld [vmem:[#allocation4 + $0x6c] sm:$0xf]
        %v453 = vld [vmem:[#allocation4 + $0x70] sm:$0xf]
        %v454 = vld [vmem:[#allocation4 + $0x74] sm:$0xf]
        %v455 = vld [vmem:[#allocation4 + $0x78] sm:$0xf]
        %v456 = vld [vmem:[#allocation4 + $0x7c] sm:$0xf]
        %v457 = vld [vmem:[#allocation4 + $0x80] sm:$0xf]
        %v458 = vld [vmem:[#allocation4 + $0x84] sm:$0xf]
        %v459 = vld [vmem:[#allocation4 + $0x88] sm:$0xf]
        %v460 = vld [vmem:[#allocation4 + $0x8c] sm:$0xf]
        %v461 = vld [vmem:[#allocation4 + $0x90] sm:$0xf]
        %v462 = vld [vmem:[#allocation4 + $0x94] sm:$0xf]
        %v463 = vld [vmem:[#allocation4 + $0x98] sm:$0xf]
        %v464 = vld [vmem:[#allocation4 + $0x9c] sm:$0xf]
        %v465 = vld [vmem:[#allocation4 + $0xa0] sm:$0xf]
        %v466 = vld [vmem:[#allocation4 + $0xa4] sm:$0xf]
        %v467 = vld [vmem:[#allocation4 + $0xa8] sm:$0xf]
        %v468 = vld [vmem:[#allocation4 + $0xac] sm:$0xf]
        %v469 = vld [vmem:[#allocation4 + $0xb0] sm:$0xf]
        %v470 = vld [vmem:[#allocation4 + $0xb4] sm:$0xf]
        %v471 = vld [vmem:[#allocation4 + $0xb8] sm:$0xf]
        %v472 = vld [vmem:[#allocation4 + $0xbc] sm:$0xf]
        %v473 = vld [vmem:[#allocation4 + $0xc0] sm:$0xf]
        %v474 = vld [vmem:[#allocation4 + $0xc4] sm:$0xf]
        %v475 = vld [vmem:[#allocation4 + $0xc8] sm:$0xf]
        %v476 = vld [vmem:[#allocation4 + $0xcc] sm:$0xf]
        %v477 = vld [vmem:[#allocation4 + $0xd0] sm:$0xf]
        %v478 = vld [vmem:[#allocation4 + $0xd4] sm:$0xf]
        %v479 = vld [vmem:[#allocation4 + $0xd8] sm:$0xf]
        %v480 = vld [vmem:[#allocation4 + $0xdc] sm:$0xf]
        %v481 = vld [vmem:[#allocation4 + $0xe0] sm:$0xf]
        %v482 = vld [vmem:[#allocation4 + $0xe4] sm:$0xf]
        %v483 = vld [vmem:[#allocation4 + $0xe8] sm:$0xf]
        %v484 = vld [vmem:[#allocation4 + $0xec] sm:$0xf]
        %v485 = vld [vmem:[#allocation4 + $0xf0] sm:$0xf]
        %v486 = vld [vmem:[#allocation4 + $0xf4] sm:$0xf]
        %v487 = vld [vmem:[#allocation4 + $0xf8] sm:$0xf]
        %v488 = vld [vmem:[#allocation4 + $0xfc] sm:$0xf]
        %v489 = vld [vmem:[#allocation4 + $0x100] sm:$0xf]
        %v490 = vld [vmem:[#allocation4 + $0x104] sm:$0xf]
        %v491 = vld [vmem:[#allocation4 + $0x108] sm:$0xf]
        %v492 = vld [vmem:[#allocation4 + $0x10c] sm:$0xf]
        %v493 = vld [vmem:[#allocation4 + $0x110] sm:$0xf]
        %v494 = vld [vmem:[#allocation4 + $0x114] sm:$0xf]
        %v495 = vld [vmem:[#allocation4 + $0x118] sm:$0xf]
        %v496 = vld [vmem:[#allocation4 + $0x11c] sm:$0xf]
        %v497 = vld [vmem:[#allocation4 + $0x120] sm:$0xf]
        %v498 = vld [vmem:[#allocation4 + $0x124] sm:$0xf]
        %v499 = vld [vmem:[#allocation4 + $0x128] sm:$0xf]
        %v500 = vld [vmem:[#allocation4 + $0x12c] sm:$0xf]
        %v501 = vld [vmem:[#allocation4 + $0x130] sm:$0xf]
        %v502 = vld [vmem:[#allocation4 + $0x134] sm:$0xf]
        %v503 = vld [vmem:[#allocation4 + $0x138] sm:$0xf]
        %v504 = vld [vmem:[#allocation4 + $0x13c] sm:$0xf]
        %v505 = vld [vmem:[#allocation4 + $0x140] sm:$0xf]
        %v506 = vld [vmem:[#allocation4 + $0x144] sm:$0xf]
        %v507 = vld [vmem:[#allocation4 + $0x148] sm:$0xf]
        %v508 = vld [vmem:[#allocation4 + $0x14c] sm:$0xf]
        %v509 = vld [vmem:[#allocation4 + $0x150] sm:$0xf]
        %v510 = vld [vmem:[#allocation4 + $0x154] sm:$0xf]
        %v511 = vld [vmem:[#allocation4 + $0x158] sm:$0xf]
        %v512 = vld [vmem:[#allocation4 + $0x15c] sm:$0xf]
        %v513 = vld [vmem:[#allocation4 + $0x160] sm:$0xf]
        %v514 = vld [vmem:[#allocation4 + $0x164] sm:$0xf]
        %v515 = vld [vmem:[#allocation4 + $0x168] sm:$0xf]
        %v516 = vld [vmem:[#allocation4 + $0x16c] sm:$0xf]
        %v517 = vld [vmem:[#allocation4 + $0x170] sm:$0xf]
        %v518 = vld [vmem:[#allocation4 + $0x174] sm:$0xf]
        %v519 = vld [vmem:[#allocation4 + $0x178] sm:$0xf]
        %v520 = vld [vmem:[#allocation4 + $0x17c] sm:$0xf]
        %v521 = vld [vmem:[#allocation4 + $0x180] sm:$0xf]
        %v522 = vld [vmem:[#allocation4 + $0x184] sm:$0xf]
        %v523 = vld [vmem:[%s2] sm:$0x1]
        %v525 = vlaneseq
        %v526 = vshrl.u32 %v525, 7
        %v527 = vsub.s32 0, %v526
        %v528 = vrot.slane %v523, %v527
        %v628 = vunpack.c.l.b16 %v425
        %v629 = vunpack.c.l.b16 %v426
        %v630 = vunpack.c.l.b16 %v427
        %v631 = vunpack.c.l.b16 %v428
        %v632 = vunpack.c.l.b16 %v429
        %v633 = vunpack.c.l.b16 %v430
        %v634 = vunpack.c.l.b16 %v431
        %v635 = vunpack.c.l.b16 %v432
        %v636 = vunpack.c.l.b16 %v433
        %v637 = vunpack.c.l.b16 %v434
        %v638 = vunpack.c.l.b16 %v435
        %v639 = vunpack.c.l.b16 %v436
        %v640 = vunpack.c.l.b16 %v437
        %v641 = vunpack.c.l.b16 %v438
        %v642 = vunpack.c.l.b16 %v439
        %v643 = vunpack.c.l.b16 %v440
        %v644 = vunpack.c.l.b16 %v441
        %v645 = vunpack.c.l.b16 %v442
        %v646 = vunpack.c.l.b16 %v443
        %v647 = vunpack.c.l.b16 %v444
        %v648 = vunpack.c.l.b16 %v445
        %v649 = vunpack.c.l.b16 %v446
        %v650 = vunpack.c.l.b16 %v447
        %v651 = vunpack.c.l.b16 %v448
        %v652 = vunpack.c.l.b16 %v449
        %v653 = vunpack.c.l.b16 %v450
        %v654 = vunpack.c.l.b16 %v451
        %v655 = vunpack.c.l.b16 %v452
        %v656 = vunpack.c.l.b16 %v453
        %v657 = vunpack.c.l.b16 %v454
        %v658 = vunpack.c.l.b16 %v455
        %v659 = vunpack.c.l.b16 %v456
        %v660 = vunpack.c.l.b16 %v457
        %v661 = vunpack.c.l.b16 %v458
        %v662 = vunpack.c.l.b16 %v459
        %v663 = vunpack.c.l.b16 %v460
        %v664 = vunpack.c.l.b16 %v461
        %v665 = vunpack.c.l.b16 %v462
        %v666 = vunpack.c.l.b16 %v463
        %v667 = vunpack.c.l.b16 %v464
        %v668 = vunpack.c.l.b16 %v465
        %v669 = vunpack.c.l.b16 %v466
        %v670 = vunpack.c.l.b16 %v467
        %v671 = vunpack.c.l.b16 %v468
        %v672 = vunpack.c.l.b16 %v469
        %v673 = vunpack.c.l.b16 %v470
        %v674 = vunpack.c.l.b16 %v471
        %v675 = vunpack.c.l.b16 %v472
        %v676 = vunpack.c.l.b16 %v473
        %v677 = vunpack.c.l.b16 %v474
        %v678 = vunpack.c.l.b16 %v475
        %v679 = vunpack.c.l.b16 %v476
        %v680 = vunpack.c.l.b16 %v477
        %v681 = vunpack.c.l.b16 %v478
        %v682 = vunpack.c.l.b16 %v479
        %v683 = vunpack.c.l.b16 %v480
        %v684 = vunpack.c.l.b16 %v481
        %v685 = vunpack.c.l.b16 %v482
        %v686 = vunpack.c.l.b16 %v483
        %v687 = vunpack.c.l.b16 %v484
        %v688 = vunpack.c.l.b16 %v485
        %v689 = vunpack.c.l.b16 %v486
        %v690 = vunpack.c.l.b16 %v487
        %v691 = vunpack.c.l.b16 %v488
        %v692 = vunpack.c.l.b16 %v489
        %v693 = vunpack.c.l.b16 %v490
        %v694 = vunpack.c.l.b16 %v491
        %v695 = vunpack.c.l.b16 %v492
        %v696 = vunpack.c.l.b16 %v493
        %v697 = vunpack.c.l.b16 %v494
        %v698 = vunpack.c.l.b16 %v495
        %v699 = vunpack.c.l.b16 %v496
        %v700 = vunpack.c.l.b16 %v497
        %v701 = vunpack.c.l.b16 %v498
        %v702 = vunpack.c.l.b16 %v499
        %v703 = vunpack.c.l.b16 %v500
        %v704 = vunpack.c.l.b16 %v501
        %v705 = vunpack.c.l.b16 %v502
        %v706 = vunpack.c.l.b16 %v503
        %v707 = vunpack.c.l.b16 %v504
        %v708 = vunpack.c.l.b16 %v505
        %v709 = vunpack.c.l.b16 %v506
        %v710 = vunpack.c.l.b16 %v507
        %v711 = vunpack.c.l.b16 %v508
        %v712 = vunpack.c.l.b16 %v509
        %v713 = vunpack.c.l.b16 %v510
        %v714 = vunpack.c.l.b16 %v511
        %v715 = vunpack.c.l.b16 %v512
        %v716 = vunpack.c.l.b16 %v513
        %v717 = vunpack.c.l.b16 %v514
        %v718 = vunpack.c.l.b16 %v515
        %v719 = vunpack.c.l.b16 %v516
        %v720 = vunpack.c.l.b16 %v517
        %v721 = vunpack.c.l.b16 %v518
        %v722 = vunpack.c.l.b16 %v519
        %v723 = vunpack.c.l.b16 %v520
        %v724 = vunpack.c.l.b16 %v521
        %v725 = vunpack.c.l.b16 %v522
        %v726 = vpack.c.b16 %v629, %v628
        %v727 = vpack.c.b16 %v631, %v630
        %v728 = vpack.c.b16 %v633, %v632
        %v729 = vpack.c.b16 %v635, %v634
        %v730 = vpack.c.b16 %v637, %v636
        %v731 = vpack.c.b16 %v639, %v638
        %v732 = vpack.c.b16 %v641, %v640
        %v733 = vpack.c.b16 %v643, %v642
        %v734 = vpack.c.b16 %v645, %v644
        %v735 = vpack.c.b16 %v647, %v646
        %v736 = vpack.c.b16 %v649, %v648
        %v737 = vpack.c.b16 %v651, %v650
        %v738 = vpack.c.b16 %v653, %v652
        %v739 = vpack.c.b16 %v655, %v654
        %v740 = vpack.c.b16 %v657, %v656
        %v741 = vpack.c.b16 %v659, %v658
        %v742 = vpack.c.b16 %v661, %v660
        %v743 = vpack.c.b16 %v663, %v662
        %v744 = vpack.c.b16 %v665, %v664
        %v745 = vpack.c.b16 %v667, %v666
        %v746 = vpack.c.b16 %v669, %v668
        %v747 = vpack.c.b16 %v671, %v670
        %v748 = vpack.c.b16 %v673, %v672
        %v749 = vpack.c.b16 %v675, %v674
        %v750 = vpack.c.b16 %v677, %v676
        %v751 = vpack.c.b16 %v679, %v678
        %v752 = vpack.c.b16 %v681, %v680
        %v753 = vpack.c.b16 %v683, %v682
        %v754 = vpack.c.b16 %v685, %v684
        %v755 = vpack.c.b16 %v687, %v686
        %v756 = vpack.c.b16 %v689, %v688
        %v757 = vpack.c.b16 %v691, %v690
        %v758 = vpack.c.b16 %v693, %v692
        %v759 = vpack.c.b16 %v695, %v694
        %v760 = vpack.c.b16 %v697, %v696
        %v761 = vpack.c.b16 %v699, %v698
        %v762 = vpack.c.b16 %v701, %v700
        %v763 = vpack.c.b16 %v703, %v702
        %v764 = vpack.c.b16 %v705, %v704
        %v765 = vpack.c.b16 %v707, %v706
        %v766 = vpack.c.b16 %v709, %v708
        %v767 = vpack.c.b16 %v711, %v710
        %v768 = vpack.c.b16 %v713, %v712
        %v769 = vpack.c.b16 %v715, %v714
        %v770 = vpack.c.b16 %v717, %v716
        %v771 = vpack.c.b16 %v719, %v718
        %v772 = vpack.c.b16 %v721, %v720
        %v773 = vpack.c.b16 %v723, %v722
        %v774 = vpack.c.b16 %v725, %v724
        %vm824 = vcmask 130048
        %v826 = vsel %vm824, %v424, 0
        %828 = vmatprep.subr.bf16.mxu0 0
        %829 = vmatpush1.bf16.msra.mxu0 %v726
        %830 = vmatprep.subr.bf16.mxu0 0
        %831 = vmatpush1.bf16.msra.mxu0 %v727
        %832 = vmatprep.subr.bf16.mxu0 0
        %833 = vmatpush1.bf16.msra.mxu0 %v728
        %834 = vmatprep.subr.bf16.mxu0 0
        %835 = vmatpush1.bf16.msra.mxu0 %v729
        %836 = vmatprep.subr.bf16.mxu0 0
        %837 = vmatpush1.bf16.msra.mxu0 %v730
        %838 = vmatprep.subr.bf16.mxu0 0
        %839 = vmatpush1.bf16.msra.mxu0 %v731
        %840 = vmatprep.subr.bf16.mxu0 0
        %841 = vmatpush1.bf16.msra.mxu0 %v732
        %842 = vmatprep.subr.bf16.mxu0 0
        %843 = vmatpush1.bf16.msra.mxu0 %v733
        %844 = vmatprep.subr.bf16.mxu0 0
        %845 = vmatpush1.bf16.msra.mxu0 %v734
        %846 = vmatprep.subr.bf16.mxu0 0
        %847 = vmatpush1.bf16.msra.mxu0 %v735
        %848 = vmatprep.subr.bf16.mxu0 0
        %849 = vmatpush1.bf16.msra.mxu0 %v736
        %850 = vmatprep.subr.bf16.mxu0 0
        %851 = vmatpush1.bf16.msra.mxu0 %v737
        %852 = vmatprep.subr.bf16.mxu0 0
        %853 = vmatpush1.bf16.msra.mxu0 %v738
        %854 = vmatprep.subr.bf16.mxu0 0
        %855 = vmatpush1.bf16.msra.mxu0 %v739
        %856 = vmatprep.subr.bf16.mxu0 0
        %857 = vmatpush1.bf16.msra.mxu0 %v740
        %858 = vmatprep.subr.bf16.mxu0 0
        %859 = vmatpush1.bf16.msra.mxu0 %v741
        %860 = vmatprep.mubr.bf16.mxu0 %v419
        %861 = vmatmul.mubr.bf16.gmra.mrb[0].mxu0 %v418
        %v862 = vpop.f32.mrb[0].mxu0
        %v863 = vadd.f32 %v528, %v862
        %v864 = vpop.f32.mrb[0].mxu0
        %v865 = vpop.f32.mrb[0].mxu0
        %v866 = vpop.f32.mrb[0].mxu0
        %867 = vdwg.mxu0
        %868 = vmatprep.subr.bf16.mxu0 0
        %869 = vmatpush1.bf16.msra.mxu0 %v742
        %870 = vmatprep.subr.bf16.mxu0 0
        %871 = vmatpush1.bf16.msra.mxu0 %v743
        %872 = vmatprep.subr.bf16.mxu0 0
        %873 = vmatpush1.bf16.msra.mxu0 %v744
        %874 = vmatprep.subr.bf16.mxu0 0
        %875 = vmatpush1.bf16.msra.mxu0 %v745
        %876 = vmatprep.subr.bf16.mxu0 0
        %877 = vmatpush1.bf16.msra.mxu0 %v746
        %878 = vmatprep.subr.bf16.mxu0 0
        %879 = vmatpush1.bf16.msra.mxu0 %v747
        %880 = vmatprep.subr.bf16.mxu0 0
        %881 = vmatpush1.bf16.msra.mxu0 %v748
        %882 = vmatprep.subr.bf16.mxu0 0
        %883 = vmatpush1.bf16.msra.mxu0 %v749
        %884 = vmatprep.subr.bf16.mxu0 0
        %885 = vmatpush1.bf16.msra.mxu0 %v750
        %886 = vmatprep.subr.bf16.mxu0 0
        %887 = vmatpush1.bf16.msra.mxu0 %v751
        %888 = vmatprep.subr.bf16.mxu0 0
        %889 = vmatpush1.bf16.msra.mxu0 %v752
        %890 = vmatprep.subr.bf16.mxu0 0
        %891 = vmatpush1.bf16.msra.mxu0 %v753
        %892 = vmatprep.subr.bf16.mxu0 0
        %893 = vmatpush1.bf16.msra.mxu0 %v754
        %894 = vmatprep.subr.bf16.mxu0 0
        %895 = vmatpush1.bf16.msra.mxu0 %v755
        %896 = vmatprep.subr.bf16.mxu0 0
        %897 = vmatpush1.bf16.msra.mxu0 %v756
        %898 = vmatprep.subr.bf16.mxu0 0
        %899 = vmatpush1.bf16.msra.mxu0 %v757
        %900 = vmatprep.mubr.bf16.mxu0 %v421
        %901 = vmatmul.mubr.bf16.gmra.mrb[0].mxu0 %v420
        %v902 = vpop.f32.mrb[0].mxu0
        %v903 = vadd.f32 %v863, %v902
        %v904 = vpop.f32.mrb[0].mxu0
        %v905 = vpop.f32.mrb[0].mxu0
        %v906 = vpop.f32.mrb[0].mxu0
        %907 = vdwg.mxu0
        %908 = vmatprep.subr.bf16.mxu0 0
        %909 = vmatpush1.bf16.msra.mxu0 %v758
        %910 = vmatprep.subr.bf16.mxu0 0
        %911 = vmatpush1.bf16.msra.mxu0 %v759
        %912 = vmatprep.subr.bf16.mxu0 0
        %913 = vmatpush1.bf16.msra.mxu0 %v760
        %914 = vmatprep.subr.bf16.mxu0 0
        %915 = vmatpush1.bf16.msra.mxu0 %v761
        %916 = vmatprep.subr.bf16.mxu0 0
        %917 = vmatpush1.bf16.msra.mxu0 %v762
        %918 = vmatprep.subr.bf16.mxu0 0
        %919 = vmatpush1.bf16.msra.mxu0 %v763
        %920 = vmatprep.subr.bf16.mxu0 0
        %921 = vmatpush1.bf16.msra.mxu0 %v764
        %922 = vmatprep.subr.bf16.mxu0 0
        %923 = vmatpush1.bf16.msra.mxu0 %v765
        %924 = vmatprep.subr.bf16.mxu0 0
        %925 = vmatpush1.bf16.msra.mxu0 %v766
        %926 = vmatprep.subr.bf16.mxu0 0
        %927 = vmatpush1.bf16.msra.mxu0 %v767
        %928 = vmatprep.subr.bf16.mxu0 0
        %929 = vmatpush1.bf16.msra.mxu0 %v768
        %930 = vmatprep.subr.bf16.mxu0 0
        %931 = vmatpush1.bf16.msra.mxu0 %v769
        %932 = vmatprep.subr.bf16.mxu0 0
        %933 = vmatpush1.bf16.msra.mxu0 %v770
        %934 = vmatprep.subr.bf16.mxu0 0
        %935 = vmatpush1.bf16.msra.mxu0 %v771
        %936 = vmatprep.subr.bf16.mxu0 0
        %937 = vmatpush1.bf16.msra.mxu0 %v772
        %938 = vmatprep.subr.bf16.mxu0 0
        %939 = vmatpush1.bf16.msra.mxu0 %v773
        %940 = vmatprep.mubr.bf16.mxu0 %v423
        %941 = vmatmul.mubr.bf16.gmra.mrb[0].mxu0 %v422
        %v942 = vpop.f32.mrb[0].mxu0
        %v943 = vadd.f32 %v903, %v942
        %v944 = vpop.f32.mrb[0].mxu0
        %v945 = vpop.f32.mrb[0].mxu0
        %v946 = vpop.f32.mrb[0].mxu0
        %947 = vdwg.mxu0
        %948 = vmatprep.subr.bf16.mxu0 0
        %949 = vmatpush1.bf16.msra.mxu0 %v774
        %950 = vmatprep.subr.bf16.mxu0 0
        %951 = vmatpush1.bf16.msra.mxu0 0
        %952 = vmatprep.subr.bf16.mxu0 0
        %953 = vmatpush1.bf16.msra.mxu0 0
        %954 = vmatprep.subr.bf16.mxu0 0
        %955 = vmatpush1.bf16.msra.mxu0 0
        %956 = vmatprep.subr.bf16.mxu0 0
        %957 = vmatpush1.bf16.msra.mxu0 0
        %958 = vmatprep.subr.bf16.mxu0 0
        %959 = vmatpush1.bf16.msra.mxu0 0
        %960 = vmatprep.subr.bf16.mxu0 0
        %961 = vmatpush1.bf16.msra.mxu0 0
        %962 = vmatprep.subr.bf16.mxu0 0
        %963 = vmatpush1.bf16.msra.mxu0 0
        %964 = vmatprep.subr.bf16.mxu0 0
        %965 = vmatpush1.bf16.msra.mxu0 0
        %966 = vmatprep.subr.bf16.mxu0 0
        %967 = vmatpush1.bf16.msra.mxu0 0
        %968 = vmatprep.subr.bf16.mxu0 0
        %969 = vmatpush1.bf16.msra.mxu0 0
        %970 = vmatprep.subr.bf16.mxu0 0
        %971 = vmatpush1.bf16.msra.mxu0 0
        %972 = vmatprep.subr.bf16.mxu0 0
        %973 = vmatpush1.bf16.msra.mxu0 0
        %974 = vmatprep.subr.bf16.mxu0 0
        %975 = vmatpush1.bf16.msra.mxu0 0
        %976 = vmatprep.subr.bf16.mxu0 0
        %977 = vmatpush1.bf16.msra.mxu0 0
        %978 = vmatprep.subr.bf16.mxu0 0
        %979 = vmatpush1.bf16.msra.mxu0 0
        %980 = vmatprep.mubr.bf16.mxu0 0
        %981 = vmatmul.mubr.bf16.gmra.mrb[0].mxu0 %v826
        %v982 = vpop.f32.mrb[0].mxu0
        %v983 = vadd.f32 %v943, %v982
        %v984 = vpop.f32.mrb[0].mxu0
        %v985 = vpop.f32.mrb[0].mxu0
        %v986 = vpop.f32.mrb[0].mxu0
        %987 = vdwg.mxu0
        %v988 = vmax.f32 %v983, 0.0
        %v989 = vpack.c.bf16 %v988, %v988
        %v990 = vld [vmem:[#allocation6] sm:$0xf]
        %v991 = vld [vmem:[#allocation6 + $0x4] sm:$0xf]
        %v992 = vld [vmem:[#allocation6 + $0x8] sm:$0xf]
        %v993 = vld [vmem:[#allocation6 + $0xc] sm:$0xf]
        %v994 = vld [vmem:[#allocation6 + $0x10] sm:$0xf]
        %v995 = vld [vmem:[#allocation6 + $0x14] sm:$0xf]
        %v996 = vld [vmem:[#allocation6 + $0x18] sm:$0xf]
        %v997 = vld [vmem:[#allocation6 + $0x1c] sm:$0xf]
        %v998 = vld [vmem:[#allocation6 + $0x20] sm:$0xf]
        %v999 = vld [vmem:[#allocation6 + $0x24] sm:$0xf]
        %v1000 = vld [vmem:[#allocation6 + $0x28] sm:$0xf]
        %v1001 = vld [vmem:[#allocation6 + $0x2c] sm:$0xf]
        %v1002 = vld [vmem:[#allocation6 + $0x30] sm:$0xf]
        %v1003 = vld [vmem:[#allocation6 + $0x34] sm:$0xf]
        %v1004 = vld [vmem:[#allocation6 + $0x38] sm:$0xf]
        %v1005 = vld [vmem:[#allocation6 + $0x3c] sm:$0xf]
        %v1006 = vld [vmem:[%s4] sm:$0x1]
        %v1008 = vlaneseq
        %v1009 = vshrl.u32 %v1008, 7
        %v1010 = vsub.s32 0, %v1009
        %v1011 = vrot.slane %v1006, %v1010
        %v1029 = vunpack.c.l.b16 %v990
        %v1030 = vunpack.c.l.b16 %v991
        %v1031 = vunpack.c.l.b16 %v992
        %v1032 = vunpack.c.l.b16 %v993
        %v1033 = vunpack.c.l.b16 %v994
        %v1034 = vunpack.c.l.b16 %v995
        %v1035 = vunpack.c.l.b16 %v996
        %v1036 = vunpack.c.l.b16 %v997
        %v1037 = vunpack.c.l.b16 %v998
        %v1038 = vunpack.c.l.b16 %v999
        %v1039 = vunpack.c.l.b16 %v1000
        %v1040 = vunpack.c.l.b16 %v1001
        %v1041 = vunpack.c.l.b16 %v1002
        %v1042 = vunpack.c.l.b16 %v1003
        %v1043 = vunpack.c.l.b16 %v1004
        %v1044 = vunpack.c.l.b16 %v1005
        %v1045 = vpack.c.b16 %v1030, %v1029
        %v1046 = vpack.c.b16 %v1032, %v1031
        %v1047 = vpack.c.b16 %v1034, %v1033
        %v1048 = vpack.c.b16 %v1036, %v1035
        %v1049 = vpack.c.b16 %v1038, %v1037
        %v1050 = vpack.c.b16 %v1040, %v1039
        %v1051 = vpack.c.b16 %v1042, %v1041
        %v1052 = vpack.c.b16 %v1044, %v1043
        %1061 = vmatprep.subr.bf16.mxu0 0
        %1062 = vmatpush1.bf16.msra.mxu0 %v1045
        %1063 = vmatprep.subr.bf16.mxu0 0
        %1064 = vmatpush1.bf16.msra.mxu0 %v1046
        %1065 = vmatprep.subr.bf16.mxu0 0
        %1066 = vmatpush1.bf16.msra.mxu0 %v1047
        %1067 = vmatprep.subr.bf16.mxu0 0
        %1068 = vmatpush1.bf16.msra.mxu0 %v1048
        %1069 = vmatprep.subr.bf16.mxu0 0
        %1070 = vmatpush1.bf16.msra.mxu0 %v1049
        %1071 = vmatprep.subr.bf16.mxu0 0
        %1072 = vmatpush1.bf16.msra.mxu0 %v1050
        %1073 = vmatprep.subr.bf16.mxu0 0
        %1074 = vmatpush1.bf16.msra.mxu0 %v1051
        %1075 = vmatprep.subr.bf16.mxu0 0
        %1076 = vmatpush1.bf16.msra.mxu0 %v1052
        %1077 = vmatprep.subr.bf16.mxu0 0
        %1078 = vmatpush1.bf16.msra.mxu0 0
        %1079 = vmatprep.subr.bf16.mxu0 0
        %1080 = vmatpush1.bf16.msra.mxu0 0
        %1081 = vmatprep.subr.bf16.mxu0 0
        %1082 = vmatpush1.bf16.msra.mxu0 0
        %1083 = vmatprep.subr.bf16.mxu0 0
        %1084 = vmatpush1.bf16.msra.mxu0 0
        %1085 = vmatprep.subr.bf16.mxu0 0
        %1086 = vmatpush1.bf16.msra.mxu0 0
        %1087 = vmatprep.subr.bf16.mxu0 0
        %1088 = vmatpush1.bf16.msra.mxu0 0
        %1089 = vmatprep.subr.bf16.mxu0 0
        %1090 = vmatpush1.bf16.msra.mxu0 0
        %1091 = vmatprep.subr.bf16.mxu0 0
        %1092 = vmatpush1.bf16.msra.mxu0 0
        %1093 = vmatprep.mubr.bf16.mxu0 0
        %1094 = vmatmul.mubr.bf16.gmra.mrb[0].mxu0 %v989
        %v1095 = vpop.f32.mrb[0].mxu0
        %v1096 = vadd.f32 %v1011, %v1095
        %v1097 = vpop.f32.mrb[0].mxu0
        %v1098 = vpop.f32.mrb[0].mxu0
        %v1099 = vpop.f32.mrb[0].mxu0
        %1100 = vdwg.mxu0
        %v1101 = vmax.f32 %v1096, 0.0
        %v1102 = vpack.c.bf16 %v1101, %v1101
        %v1103 = vld [vmem:[#allocation7] sm:$0xf]
        %v1104 = vld [vmem:[#allocation7 + $0x4] sm:$0xf]
        %v1105 = vld [vmem:[#allocation7 + $0x8] sm:$0xf]
        %v1106 = vld [vmem:[#allocation7 + $0xc] sm:$0xf]
        %v1107 = vld [vmem:[#allocation7 + $0x10] sm:$0xf]
        %v1108 = vld [vmem:[#allocation7 + $0x14] sm:$0xf]
        %v1109 = vld [vmem:[#allocation7 + $0x18] sm:$0xf]
        %v1110 = vld [vmem:[#allocation7 + $0x1c] sm:$0xf]
        %v1111 = vld [vmem:[#allocation7 + $0x20] sm:$0xf]
        %v1112 = vld [vmem:[#allocation7 + $0x24] sm:$0xf]
        %v1113 = vld [vmem:[#allocation7 + $0x28] sm:$0xf]
        %v1114 = vld [vmem:[#allocation7 + $0x2c] sm:$0xf]
        %v1115 = vld [vmem:[#allocation7 + $0x30] sm:$0xf]
        %v1116 = vld [vmem:[#allocation7 + $0x34] sm:$0xf]
        %v1117 = vld [vmem:[#allocation7 + $0x38] sm:$0xf]
        %v1118 = vld [vmem:[#allocation7 + $0x3c] sm:$0xf]
        %v1119 = vld [vmem:[%s6] sm:$0x1]
        %v1121 = vlaneseq
        %v1122 = vshrl.u32 %v1121, 7
        %v1123 = vsub.s32 0, %v1122
        %v1124 = vrot.slane %v1119, %v1123
        %v1142 = vunpack.c.l.b16 %v1103
        %v1143 = vunpack.c.l.b16 %v1104
        %v1144 = vunpack.c.l.b16 %v1105
        %v1145 = vunpack.c.l.b16 %v1106
        %v1146 = vunpack.c.l.b16 %v1107
        %v1147 = vunpack.c.l.b16 %v1108
        %v1148 = vunpack.c.l.b16 %v1109
        %v1149 = vunpack.c.l.b16 %v1110
        %v1150 = vunpack.c.l.b16 %v1111
        %v1151 = vunpack.c.l.b16 %v1112
        %v1152 = vunpack.c.l.b16 %v1113
        %v1153 = vunpack.c.l.b16 %v1114
        %v1154 = vunpack.c.l.b16 %v1115
        %v1155 = vunpack.c.l.b16 %v1116
        %v1156 = vunpack.c.l.b16 %v1117
        %v1157 = vunpack.c.l.b16 %v1118
        %v1158 = vpack.c.b16 %v1143, %v1142
        %v1159 = vpack.c.b16 %v1145, %v1144
        %v1160 = vpack.c.b16 %v1147, %v1146
        %v1161 = vpack.c.b16 %v1149, %v1148
        %v1162 = vpack.c.b16 %v1151, %v1150
        %v1163 = vpack.c.b16 %v1153, %v1152
        %v1164 = vpack.c.b16 %v1155, %v1154
        %v1165 = vpack.c.b16 %v1157, %v1156
        %1174 = vmatprep.subr.bf16.mxu0 0
        %1175 = vmatpush1.bf16.msra.mxu0 %v1158
        %1176 = vmatprep.subr.bf16.mxu0 0
        %1177 = vmatpush1.bf16.msra.mxu0 %v1159
        %1178 = vmatprep.subr.bf16.mxu0 0
        %1179 = vmatpush1.bf16.msra.mxu0 %v1160
        %1180 = vmatprep.subr.bf16.mxu0 0
        %1181 = vmatpush1.bf16.msra.mxu0 %v1161
        %1182 = vmatprep.subr.bf16.mxu0 0
        %1183 = vmatpush1.bf16.msra.mxu0 %v1162
        %1184 = vmatprep.subr.bf16.mxu0 0
        %1185 = vmatpush1.bf16.msra.mxu0 %v1163
        %1186 = vmatprep.subr.bf16.mxu0 0
        %1187 = vmatpush1.bf16.msra.mxu0 %v1164
        %1188 = vmatprep.subr.bf16.mxu0 0
        %1189 = vmatpush1.bf16.msra.mxu0 %v1165
        %1190 = vmatprep.subr.bf16.mxu0 0
        %1191 = vmatpush1.bf16.msra.mxu0 0
        %1192 = vmatprep.subr.bf16.mxu0 0
        %1193 = vmatpush1.bf16.msra.mxu0 0
        %1194 = vmatprep.subr.bf16.mxu0 0
        %1195 = vmatpush1.bf16.msra.mxu0 0
        %1196 = vmatprep.subr.bf16.mxu0 0
        %1197 = vmatpush1.bf16.msra.mxu0 0
        %1198 = vmatprep.subr.bf16.mxu0 0
        %1199 = vmatpush1.bf16.msra.mxu0 0
        %1200 = vmatprep.subr.bf16.mxu0 0
        %1201 = vmatpush1.bf16.msra.mxu0 0
        %1202 = vmatprep.subr.bf16.mxu0 0
        %1203 = vmatpush1.bf16.msra.mxu0 0
        %1204 = vmatprep.subr.bf16.mxu0 0
        %1205 = vmatpush1.bf16.msra.mxu0 0
        %1206 = vmatprep.mubr.bf16.mxu0 0
        %1207 = vmatmul.mubr.bf16.gmra.mrb[0].mxu0 %v1102
        %v1208 = vpop.f32.mrb[0].mxu0
        %v1209 = vadd.f32 %v1124, %v1208
        %v1210 = vpop.f32.mrb[0].mxu0
        %v1211 = vpop.f32.mrb[0].mxu0
        %v1212 = vpop.f32.mrb[0].mxu0
        %1213 = vdwg.mxu0
        %v1214 = vmax.f32 %v1209, 0.0
        %1215 = vst [vmem:[%s403] sm:$0xff] %v1214
        %v1216 = vlaneseq
        %v1217 = vand.u32 %v1216, 127
        %v1218 = vlaneseq
        %v1219 = vshrl.u32 %v1218, 7
        %s1220 = smul.u32 %s26, 8
        %v1221 = vstv %s1220
        %v1222 = vadd.s32 %v1219, %v1221
        %vm1223 = vcmp.lt.s32.totalorder %v1217, 10
        %vm1224 = vcmp.lt.s32.totalorder %v1222, 12
        %vm1225 = vmand %vm1223, %vm1224
        %v1226 = vsel %vm1225, %v1214, -inf
        %1227 = vmax.xlane.f32.xlu0 %v1226
        %v1228 = vpop.xlane.xlu0 %1227
        %v1229 = vrot.slane %v1228, 4
        %v1230 = vmax.f32 %v1228, %v1229
        %v1231 = vrot.slane %v1230, 2
        %v1232 = vmax.f32 %v1230, %v1231
        %v1233 = vrot.slane %v1232, 1
        %v1234 = vmax.f32 %v1232, %v1233
        %s1235 = vtos %v1234
        %v1236 = vstv %s1235
        %v1237 = vsub.f32 %v1226, %v1236
        %v1238 = vmul.f32 %v1237, 1.442695
        %v1239 = vpow.pop %v1238
        %v1240 = vsel %vm1225, %v1239, 0.0
        %1241 = vadd.xlane.f32.xlu0 %v1240
        %v1242 = vpop.xlane.xlu0 %1241
        %v1243 = vrot.slane %v1242, 4
        %v1244 = vadd.f32 %v1242, %v1243
        %v1245 = vrot.slane %v1244, 2
        %v1246 = vadd.f32 %v1244, %v1245
        %v1247 = vrot.slane %v1246, 1
        %v1248 = vadd.f32 %v1246, %v1247
        %s1249 = vtos %v1248
        %vm1250 = vcmask 0
        %1251 = vst.msk [vmem:[%s406] sm:$0x1] %vm1250, %v1236
        %v1252 = vstv %s1249
        %1253 = vst.msk [vmem:[%s409] sm:$0x1] %vm1250, %v1252
        %p1254 = scmp.lt.s32.totalorder %s26, 1
        %s1255 = scalar_select %p1254, %s26, 1
        %s1256 = smul.addr %s1255, 8
        %s1257 = scalar_lea.vmem %s7, %s1256
        %p1258 = scmp.lt.s32.totalorder %s26, 1
        %s1259 = scalar_select %p1258, %s26, 1
        %s1260 = scalar_lea.vmem %s8, %s1259
        %p1261 = scmp.lt.s32.totalorder %s26, 1
        %s1262 = scalar_select %p1261, %s26, 1
        %s1263 = scalar_lea.vmem %s9, %s1262
        // Predicated region
        $region65: #{forward.1} parent=47 // pred_check
          %p1264 = pneg %p196
        $region66: #{forward.1} parent=47 // pred_check_branch
          %1266 = sbr.rel (%p1264) target = $region68
        $region67: #{forward.1} parent=47 // pred_region
          _
        $region68: #{forward.1} parent=47 // pred_fallthru
          _
        // Predicated region
        $region69: #{forward.1} parent=47 // pred_check
          %p1267 = pneg %p222
        $region70: #{forward.1} parent=47 // pred_check_branch
          %1269 = sbr.rel (%p1267) target = $region72
        $region71: #{forward.1} parent=47 // pred_region
          _
        $region72: #{forward.1} parent=47 // pred_fallthru
          _
        // Predicated region
        $region73: #{forward.1} parent=47 // pred_check
          %p1270 = pneg %p248
        $region74: #{forward.1} parent=47 // pred_check_branch
          %1272 = sbr.rel (%p1270) target = $region76
        $region75: #{forward.1} parent=47 // pred_region
          _
        $region76: #{forward.1} parent=47 // pred_fallthru
          _
      $region48: #{forward.1} parent=5 // pred_fallthru
        _
      %p1273 = scmp.le.s32.totalorder 2, %s21
      // Predicated region
      $region77: #{forward.1} parent=5 // pred_check
        %p1274 = pneg %p1273
      $region78: #{forward.1} parent=5 // pred_check_branch
        %1276 = sbr.rel (%p1274) target = $region80
      $region79: #{forward.1} parent=5 // pred_region
        %s1277 = ssub.s32 %s21, 2
        // Predicated region
        $region81: #{forward.1} parent=79 // pred_check
          %p1278 = pneg %p202
        $region82: #{forward.1} parent=79 // pred_check_branch
          %1280 = sbr.rel (%p1278) target = $region84
        $region83: #{forward.1} parent=79 // pred_region
          %p1281 = scmp.lt.s32.totalorder %s27, 1
          %s1282 = scalar_select %p1281, %s27, 1
          %s1283 = smul.addr %s1282, 8
          %s1284 = scalar_lea.vmem %s7, %s1283
        $region84: #{forward.1} parent=79 // pred_fallthru
          _
        // Predicated region
        $region85: #{forward.1} parent=79 // pred_check
          %p1285 = pneg %p228
        $region86: #{forward.1} parent=79 // pred_check_branch
          %1287 = sbr.rel (%p1285) target = $region88
        $region87: #{forward.1} parent=79 // pred_region
          %p1288 = scmp.lt.s32.totalorder %s27, 1
          %s1289 = scalar_select %p1288, %s27, 1
          %s1290 = scalar_lea.vmem %s8, %s1289
        $region88: #{forward.1} parent=79 // pred_fallthru
          _
        // Predicated region
        $region89: #{forward.1} parent=79 // pred_check
          %p1291 = pneg %p254
        $region90: #{forward.1} parent=79 // pred_check_branch
          %1293 = sbr.rel (%p1291) target = $region92
        $region91: #{forward.1} parent=79 // pred_region
          %p1294 = scmp.lt.s32.totalorder %s27, 1
          %s1295 = scalar_select %p1294, %s27, 1
          %s1296 = scalar_lea.vmem %s9, %s1295
        $region92: #{forward.1} parent=79 // pred_fallthru
          _
      $region80: #{forward.1} parent=5 // pred_fallthru
        _
    $region6: #{forward.1} parent=1 // loop_footer
      %s25 = sadd.s32 1, %s21
    $region7: #{forward.1} parent=1 // loop_footer_branch
      %20 = sbr.rel target = $region3
    $region8: #{forward.1} parent=1 // loop_exit
      _
    %1297 = vsyncpa [#allocation3], 1
    %s1298 = scalar_lea.sflag [#allocation3], 1
    %1299 = vsyncpa %s1298, 1
    %1300 = vsyncpa [#allocation5], 1
    %1301 = vsyncpa [#allocation8], 1

</llo_original>
